<compile_context>
chip_gen: v7x
topology: tpu7x:2x2x1
jax: 0.10.0
libtpu: 0.0.40
codegen_flags: <defaults>
</compile_context>

<pallas_src>
import functools

import jax
import jax.numpy as jnp
from jax import lax
from jax.experimental import pallas as pl
from jax.experimental.pallas import tpu as pltpu


def _round_up(x, m):
    return ((x + m - 1) // m) * m


def _pad_axis(a, axis, target):
    pad = target - a.shape[axis]
    if pad <= 0:
        return a
    widths = [(0, 0)] * a.ndim
    widths[axis] = (0, pad)
    return jnp.pad(a, widths)


def _vmem_limit_bytes(tile_bytes):
    # double-buffered pipeline + headroom; stay under v7x's 64 MiB physical VMEM
    return int(min(max(2 * tile_bytes + (4 << 20), 16 << 20), 48 << 20))


# ---------------------------------------------------------------------------
# Kernel 1: trunk MLP — depends only on the fixed node coordinates.
#           Computed once; its (N, P) output is reused for every branch batch.
# ---------------------------------------------------------------------------
def trunk_kernel(tx_ref, tw1_ref, tb1_ref, tw2_ref, tb2_ref, tw3_ref, tb3_ref,
                 t_ref, *, matmul_dtype):
    f32 = jnp.float32
    tx = tx_ref[...]                      # (TN, dim)
    tw1 = tw1_ref[...]                    # (dim, H)
    tb1 = tb1_ref[...]                    # (1, H)   -- bias reads hoisted once
    tb2 = tb2_ref[...]
    tb3 = tb3_ref[...]

    # Layer 1 has K == coordinate dim (2): a K=2 MXU matmul wastes 126/128
    # lanes, so express it as a rank-`dim` VPU multiply-add instead.
    h = tb1
    for d in range(tw1.shape[0]):         # static, tiny (dim ~ 1..3)
        h = h + tx[:, d:d + 1] * tw1[d:d + 1, :]
    t = jnp.tanh(h)

    t = jnp.tanh(
        jnp.dot(t.astype(matmul_dtype), tw2_ref[...].astype(matmul_dtype),
                preferred_element_type=f32) + tb2)
    t = jnp.tanh(
        jnp.dot(t.astype(matmul_dtype), tw3_ref[...].astype(matmul_dtype),
                preferred_element_type=f32) + tb3)
    t_ref[...] = t


def trunk_forward(trunk_x_pad, params_pad, *, tn, matmul_dtype=jnp.float32):
    N_pad, dim = trunk_x_pad.shape
    H = params_pad["tw1"].shape[1]
    P_pad = params_pad["tw3"].shape[1]

    resident = lambda j: (0, 0)           # weights/biases stay VMEM-resident
    kernel = functools.partial(trunk_kernel, matmul_dtype=matmul_dtype)

    flops = 2 * N_pad * (dim * H + H * H + H * P_pad)
    transc = N_pad * (2 * H + P_pad)                       # tanh evaluations
    bytes_acc = 4 * (N_pad * dim + dim * H + H * H + H * P_pad
                     + 2 * H + P_pad + N_pad * P_pad)
    tile_bytes = 4 * (tn * dim + dim * H + H * H + H * P_pad
                      + 2 * H + P_pad + tn * P_pad)

    return pl.pallas_call(
        kernel,
        out_shape=jax.ShapeDtypeStruct((N_pad, P_pad), jnp.float32),
        grid_spec=pltpu.PrefetchScalarGridSpec(
            num_scalar_prefetch=0,
            grid=(N_pad // tn,),
            in_specs=[
                pl.BlockSpec((tn, dim), lambda j: (j, 0)),   # node coords tile
                pl.BlockSpec((dim, H), resident),
                pl.BlockSpec((1, H), resident),
                pl.BlockSpec((H, H), resident),
                pl.BlockSpec((1, H), resident),
                pl.BlockSpec((H, P_pad), resident),
                pl.BlockSpec((1, P_pad), resident),
            ],
            out_specs=pl.BlockSpec((tn, P_pad), lambda j: (j, 0)),
        ),
        compiler_params=pltpu.CompilerParams(
            dimension_semantics=("parallel",),
            vmem_limit_bytes=_vmem_limit_bytes(tile_bytes),
        ),
        cost_estimate=pl.CostEstimate(
            flops=flops, transcendentals=transc, bytes_accessed=bytes_acc),
    )(trunk_x_pad,
      params_pad["tw1"], params_pad["tb1"],
      params_pad["tw2"], params_pad["tb2"],
      params_pad["tw3"], params_pad["tb3"])


# ---------------------------------------------------------------------------
# Kernel 2: branch MLP + DeepONet contraction over basis functions.
# ---------------------------------------------------------------------------
def deeponet_kernel(bx_ref,
                    bw1_ref, bb1_ref, bw2_ref, bb2_ref, bw3_ref, bb3_ref,
                    t_ref, b0_ref, out_ref, branch_sc, *, matmul_dtype):
    f32 = jnp.float32

    # Branch MLP only once per batch tile (j == 0); result parked in VMEM
    # scratch and reused across the whole node-tile sweep.
    @pl.when(pl.program_id(1) == 0)
    def _():
        bb1 = bb1_ref[...]
        bb2 = bb2_ref[...]
        bb3 = bb3_ref[...]
        h = jnp.dot(bx_ref[...].astype(matmul_dtype),
                    bw1_ref[...].astype(matmul_dtype),
                    preferred_element_type=f32) + bb1
        h = jnp.maximum(h, 0.0)                            # nn.ReLU()
        h = jnp.dot(h.astype(matmul_dtype),
                    bw2_ref[...].astype(matmul_dtype),
                    preferred_element_type=f32) + bb2
        h = jnp.maximum(h, 0.0)
        branch_sc[...] = jnp.dot(h.astype(matmul_dtype),
                                 bw3_ref[...].astype(matmul_dtype),
                                 preferred_element_type=f32) + bb3

    # G(u)(y) = sum_k branch_k * trunk_k + b0; contract over the shared last
    # dim of both operands — no transpose of the trunk tile is materialized.
    out_ref[...] = lax.dot_general(
        branch_sc[...].astype(matmul_dtype),
        t_ref[...].astype(matmul_dtype),
        dimension_numbers=(((1,), (1,)), ((), ())),
        preferred_element_type=f32) + b0_ref[0, 0]


def branch_contract_forward(branch_x_pad, t_pad, params_pad, b0, *, tb, tn,
                            matmul_dtype=jnp.float32):
    B_pad, Kb = branch_x_pad.shape
    N_pad, P_pad = t_pad.shape
    H = params_pad["bw1"].shape[1]

    res = lambda i, j: (0, 0)               # weights stay VMEM-resident
    kernel = functools.partial(deeponet_kernel, matmul_dtype=matmul_dtype)

    flops = (2 * B_pad * (Kb * H + H * H + H * P_pad)
             + 2 * B_pad * N_pad * P_pad)
    bytes_acc = 4 * (B_pad * Kb + Kb * H + H * H + H * P_pad
                     + N_pad * P_pad + B_pad * N_pad)
    tile_bytes = 4 * (tb * Kb + Kb * H + H * H + H * P_pad + 2 * H + P_pad
                      + tn * P_pad + tb * tn + tb * P_pad)

    return pl.pallas_call(
        kernel,
        out_shape=jax.ShapeDtypeStruct((B_pad, N_pad), jnp.float32),
        grid_spec=pltpu.PrefetchScalarGridSpec(
            num_scalar_prefetch=0,
            grid=(B_pad // tb, N_pad // tn),
            in_specs=[
                pl.BlockSpec((tb, Kb), lambda i, j: (i, 0)),      # branch inputs
                pl.BlockSpec((Kb, H), res),
                pl.BlockSpec((1, H), res),
                pl.BlockSpec((H, H), res),
                pl.BlockSpec((1, H), res),
                pl.BlockSpec((H, P_pad), res),
                pl.BlockSpec((1, P_pad), res),
                pl.BlockSpec((tn, P_pad), lambda i, j: (j, 0)),   # trunk tile
                pl.BlockSpec(memory_space=pltpu.MemorySpace.SMEM),  # b0 scalar
            ],
            out_specs=pl.BlockSpec((tb, tn), lambda i, j: (i, j)),
            scratch_shapes=[pltpu.VMEM((tb, P_pad), jnp.float32)],
        ),
        compiler_params=pltpu.CompilerParams(
            # Batch tiles shard across TensorCores; the node-tile axis carries
            # the branch scratch, so it must stay "arbitrary".
            dimension_semantics=("parallel", "arbitrary"),
            vmem_limit_bytes=_vmem_limit_bytes(tile_bytes),
        ),
        cost_estimate=pl.CostEstimate(
            flops=flops, transcendentals=0, bytes_accessed=bytes_acc),
    )(branch_x_pad,
      params_pad["bw1"], params_pad["bb1"],
      params_pad["bw2"], params_pad["bb2"],
      params_pad["bw3"], params_pad["bb3"],
      t_pad, b0)


# ---------------------------------------------------------------------------
# Full forward wrapper: padding, tiling, trunk caching.
# ---------------------------------------------------------------------------
def _pad_basis_params(params, p_pad):
    """Zero-pad the basis-function (output) dim of the last layers to p_pad.
    Padded branch/trunk columns are exactly zero, so the contraction is exact."""
    out = dict(params)
    for k in ("bw3", "bb3", "tw3", "tb3"):
        out[k] = _pad_axis(params[k], 1, p_pad)
    return out


def deeponet_forward(branch_x, trunk_x, params, *, matmul_dtype=jnp.float32):
    B, _ = branch_x.shape
    N, _ = trunk_x.shape
    P = params["bw3"].shape[1]

    # Lane-dense node tiles (multiple of 128), sublane-aligned batch tiles.
    N_pad = _round_up(N, 128)
    TN = next(t for t in (1024, 512, 256, 128) if N_pad % t == 0)
    B_pad = _round_up(B, 8)
    TB = next(t for t in (512, 256, 128, 64, 32, 16, 8) if B_pad % t == 0)
    P_pad = _round_up(P, 128)

    params_pad = _pad_basis_params(params, P_pad)
    trunk_x_pad = _pad_axis(trunk_x, 0, N_pad)
    branch_x_pad = _pad_axis(branch_x, 0, B_pad)

    # Trunk depends only on the fixed nodes -> compute once; in real inference
    # `t_pad` is cached and reused across every branch batch.
    t_pad = trunk_forward(trunk_x_pad, params_pad, tn=TN,
                          matmul_dtype=matmul_dtype)

    out_pad = branch_contract_forward(branch_x_pad, t_pad, params_pad,
                                      params["b0"], tb=TB, tn=TN,
                                      matmul_dtype=matmul_dtype)
    return out_pad[:B, :N]


# ---------------------------------------------------------------------------
# Pure-JAX reference for verification
# ---------------------------------------------------------------------------
def deeponet_ref(branch_x, trunk_x, p):
    h = jnp.maximum(branch_x @ p["bw1"] + p["bb1"], 0.0)
    h = jnp.maximum(h @ p["bw2"] + p["bb2"], 0.0)
    branch = h @ p["bw3"] + p["bb3"]
    t = jnp.tanh(trunk_x @ p["tw1"] + p["tb1"])
    t = jnp.tanh(t @ p["tw2"] + p["tb2"])
    t = jnp.tanh(t @ p["tw3"] + p["tb3"])
    return branch @ t.T + p["b0"][0, 0]


# ---------------------------------------------------------------------------
# Deterministic parameter construction (shapes implied by __init__)
# ---------------------------------------------------------------------------
def make_params(key, branch_in_dim, trunk_in_dim, hidden, num_basis_functions):
    ks = jax.random.split(key, 6)

    def dense(k, fan_in, fan_out):
        scale = 1.0 / jnp.sqrt(jnp.float32(fan_in))
        return jax.random.normal(k, (fan_in, fan_out), jnp.float32) * scale

    return {
        # branch net
        "bw1": dense(ks[0], branch_in_dim, hidden),
        "bb1": jnp.zeros((1, hidden), jnp.float32),
        "bw2": dense(ks[1], hidden, hidden),
        "bb2": jnp.zeros((1, hidden), jnp.float32),
        "bw3": dense(ks[2], hidden, num_basis_functions),
        "bb3": jnp.zeros((1, num_basis_functions), jnp.float32),
        # trunk net
        "tw1": dense(ks[3], trunk_in_dim, hidden),
        "tb1": jnp.zeros((1, hidden), jnp.float32),
        "tw2": dense(ks[4], hidden, hidden),
        "tb2": jnp.zeros((1, hidden), jnp.float32),
        "tw3": dense(ks[5], hidden, num_basis_functions),
        "tb3": jnp.zeros((1, num_basis_functions), jnp.float32),
        # scalar output bias
        "b0": jnp.array([[0.05]], dtype=jnp.float32),
    }


if __name__ == "__main__":
    # Small shapes consistent with the module:
    #   nodes: N=64 grid points, coordinate dim 2
    #   num_branch_inputs=2 sampled functions at the nodes -> branch dim 2*N
    #   num_basis_functions=32 (scaled down from the default 240)
    B = 2
    N = 64
    DIM = 2
    NUM_BRANCH_INPUTS = 2
    HIDDEN = 32
    P = 32

    # TODO(synk): feature_norms / permutation_indices / remove_bc (BC_trunk)
    # are dataset-specific, abstract bookkeeping in DeepOnetBase and are not
    # part of this synthetic forward pass.

    key = jax.random.PRNGKey(0)
    k_bx, k_nodes, k_params = jax.random.split(key, 3)

    trunk_x = jax.random.uniform(k_nodes, (N, DIM), jnp.float32)
    branch_x = jax.random.normal(k_bx, (B, NUM_BRANCH_INPUTS * N), jnp.float32)
    params = make_params(k_params, NUM_BRANCH_INPUTS * N, DIM, HIDDEN, P)

    # NOTE: on v6e/v5e at production sizes pass matmul_dtype=jnp.bfloat16
    # (f32 accumulation is kept); f32 default preserves the tight tolerance.
    forward = jax.jit(functools.partial(deeponet_forward,
                                        matmul_dtype=jnp.float32))
    out = forward(branch_x, trunk_x, params)
    out = jax.block_until_ready(out)

    ref = deeponet_ref(branch_x, trunk_x, params)
    assert out.shape == (B, N)
    assert jnp.allclose(out, ref, atol=1e-4, rtol=1e-4), "mismatch vs JAX reference"

    print("KERNEL_OK")
</pallas_src>

<mosaic_0001>
module attributes {stable_mosaic.version = 11 : i64} {
  func.func @deeponet_kernel(%arg0: i32, %arg1: i32, %arg2: memref<8x128xf32, #tpu.memory_space<vmem>>, %arg3: memref<128x32xf32, #tpu.memory_space<vmem>>, %arg4: memref<1x32xf32, #tpu.memory_space<vmem>>, %arg5: memref<32x32xf32, #tpu.memory_space<vmem>>, %arg6: memref<1x32xf32, #tpu.memory_space<vmem>>, %arg7: memref<32x128xf32, #tpu.memory_space<vmem>>, %arg8: memref<1x128xf32, #tpu.memory_space<vmem>>, %arg9: memref<128x128xf32, #tpu.memory_space<vmem>>, %arg10: memref<1x1xf32, #tpu.memory_space<smem>>, %arg11: memref<8x128xf32, #tpu.memory_space<vmem>>, %arg12: memref<8x128xf32, #tpu.memory_space<vmem>>) attributes {dimension_semantics = [#tpu.dimension_semantics<parallel>, #tpu.dimension_semantics<arbitrary>], iteration_bounds = array<i64: 1, 1>, scalar_prefetch = 0 : i64, scratch_operands = 1 : i64, tpu.core_type = #tpu.core_type<tc>, window_params = [{transform_indices = @transform_0, window_bounds = array<i64: 8, 128>}, {pipeline_mode = #tpu.pipeline_mode<synchronous>, transform_indices = @transform_1, window_bounds = array<i64: 128, 32>}, {pipeline_mode = #tpu.pipeline_mode<synchronous>, transform_indices = @transform_2, window_bounds = array<i64: 1, 32>}, {pipeline_mode = #tpu.pipeline_mode<synchronous>, transform_indices = @transform_3, window_bounds = array<i64: 32, 32>}, {pipeline_mode = #tpu.pipeline_mode<synchronous>, transform_indices = @transform_4, window_bounds = array<i64: 1, 32>}, {pipeline_mode = #tpu.pipeline_mode<synchronous>, transform_indices = @transform_5, window_bounds = array<i64: 32, 128>}, {pipeline_mode = #tpu.pipeline_mode<synchronous>, transform_indices = @transform_6, window_bounds = array<i64: 1, 128>}, {transform_indices = @transform_7, window_bounds = array<i64: 128, 128>}, {transform_indices = @transform_8, window_bounds = array<i64: 1, 1>}, {transform_indices = @transform_9, window_bounds = array<i64: 8, 128>}]} {
    %c0_i32 = arith.constant 0 : i32
    %0 = arith.cmpi eq, %arg1, %c0_i32 : i32
    %1 = arith.extui %0 : i1 to i32
    %c0_i32_0 = arith.constant 0 : i32
    %2 = arith.cmpi ne, %1, %c0_i32_0 : i32
    scf.if %2 {
      %c0_8 = arith.constant 0 : index
      %c0_9 = arith.constant 0 : index
      %10 = vector.load %arg4[%c0_8, %c0_9] : memref<1x32xf32, #tpu.memory_space<vmem>>, vector<1x32xf32>
      %c0_10 = arith.constant 0 : index
      %c0_11 = arith.constant 0 : index
      %11 = vector.load %arg6[%c0_10, %c0_11] : memref<1x32xf32, #tpu.memory_space<vmem>>, vector<1x32xf32>
      %c0_12 = arith.constant 0 : index
      %c0_13 = arith.constant 0 : index
      %12 = vector.load %arg8[%c0_12, %c0_13] : memref<1x128xf32, #tpu.memory_space<vmem>>, vector<1x128xf32>
      %c0_14 = arith.constant 0 : index
      %c0_15 = arith.constant 0 : index
      %13 = vector.load %arg2[%c0_14, %c0_15] : memref<8x128xf32, #tpu.memory_space<vmem>>, vector<8x128xf32>
      %c0_16 = arith.constant 0 : index
      %c0_17 = arith.constant 0 : index
      %14 = vector.load %arg3[%c0_16, %c0_17] : memref<128x32xf32, #tpu.memory_space<vmem>>, vector<128x32xf32>
      %cst_18 = arith.constant dense<0.000000e+00> : vector<8x32xf32>
      %15 = tpu.matmul %13, %14, %cst_18 {dimension_numbers = #tpu.dot_dimension_numbers<[1], [0], [0], [1], [0, 0, 1, 1], [], []>} : vector<8x128xf32>, vector<128x32xf32>, vector<8x32xf32> -> vector<8x32xf32>
      %16 = vector.broadcast %10 : vector<1x32xf32> to vector<8x32xf32>
      %17 = arith.addf %15, %16 : vector<8x32xf32>
      %cst_19 = arith.constant 0.000000e+00 : f32
      %18 = vector.broadcast %cst_19 : f32 to vector<8x32xf32>
      %19 = arith.maximumf %17, %18 : vector<8x32xf32>
      %c0_20 = arith.constant 0 : index
      %c0_21 = arith.constant 0 : index
      %20 = vector.load %arg5[%c0_20, %c0_21] : memref<32x32xf32, #tpu.memory_space<vmem>>, vector<32x32xf32>
      %cst_22 = arith.constant dense<0.000000e+00> : vector<8x32xf32>
      %21 = tpu.matmul %19, %20, %cst_22 {dimension_numbers = #tpu.dot_dimension_numbers<[1], [0], [0], [1], [0, 0, 1, 1], [], []>} : vector<8x32xf32>, vector<32x32xf32>, vector<8x32xf32> -> vector<8x32xf32>
      %22 = vector.broadcast %11 : vector<1x32xf32> to vector<8x32xf32>
      %23 = arith.addf %21, %22 : vector<8x32xf32>
      %cst_23 = arith.constant 0.000000e+00 : f32
      %24 = vector.broadcast %cst_23 : f32 to vector<8x32xf32>
      %25 = arith.maximumf %23, %24 : vector<8x32xf32>
      %c0_24 = arith.constant 0 : index
      %c0_25 = arith.constant 0 : index
      %26 = vector.load %arg7[%c0_24, %c0_25] : memref<32x128xf32, #tpu.memory_space<vmem>>, vector<32x128xf32>
      %cst_26 = arith.constant dense<0.000000e+00> : vector<8x128xf32>
      %27 = tpu.matmul %25, %26, %cst_26 {dimension_numbers = #tpu.dot_dimension_numbers<[1], [0], [0], [1], [0, 0, 1, 1], [], []>} : vector<8x32xf32>, vector<32x128xf32>, vector<8x128xf32> -> vector<8x128xf32>
      %28 = vector.broadcast %12 : vector<1x128xf32> to vector<8x128xf32>
      %29 = arith.addf %27, %28 : vector<8x128xf32>
      %c0_27 = arith.constant 0 : index
      %c0_28 = arith.constant 0 : index
      %30 = vector.load %arg12[%c0_27, %c0_28] : memref<8x128xf32, #tpu.memory_space<vmem>>, vector<8x128xf32>
      tpu.vector_store %arg12[%c0_27, %c0_28], %29 {strides = array<i32>} : memref<8x128xf32, #tpu.memory_space<vmem>>, vector<8x128xf32>,
    } else {
    }
    %c0 = arith.constant 0 : index
    %c0_1 = arith.constant 0 : index
    %3 = vector.load %arg12[%c0, %c0_1] : memref<8x128xf32, #tpu.memory_space<vmem>>, vector<8x128xf32>
    %c0_2 = arith.constant 0 : index
    %c0_3 = arith.constant 0 : index
    %4 = vector.load %arg9[%c0_2, %c0_3] : memref<128x128xf32, #tpu.memory_space<vmem>>, vector<128x128xf32>
    %cst = arith.constant dense<0.000000e+00> : vector<8x128xf32>
    %5 = tpu.matmul %3, %4, %cst {dimension_numbers = #tpu.dot_dimension_numbers<[1], [1], [0], [0], [0, 0, 1, 0], [], []>} : vector<8x128xf32>, vector<128x128xf32>, vector<8x128xf32> -> vector<8x128xf32>
    %c0_4 = arith.constant 0 : index
    %c0_5 = arith.constant 0 : index
    %6 = memref.load %arg10[%c0_4, %c0_5] : memref<1x1xf32, #tpu.memory_space<smem>>
    %7 = vector.broadcast %6 : f32 to vector<8x128xf32>
    %8 = arith.addf %5, %7 : vector<8x128xf32>
    %c0_6 = arith.constant 0 : index
    %c0_7 = arith.constant 0 : index
    %9 = vector.load %arg11[%c0_6, %c0_7] : memref<8x128xf32, #tpu.memory_space<vmem>>, vector<8x128xf32>
    tpu.vector_store %arg11[%c0_6, %c0_7], %8 {strides = array<i32>} : memref<8x128xf32, #tpu.memory_space<vmem>>, vector<8x128xf32>,
    return
  }
  func.func @transform_0(%arg0: i32, %arg1: i32) -> (i32, i32) {
    %c0_i32 = arith.constant 0 : i32
    %c0_i32_0 = arith.constant 0 : i32
    return %arg0, %c0_i32 : i32, i32
  }
  func.func @transform_1(%arg0: i32, %arg1: i32) -> (i32, i32) {
    %c0_i32 = arith.constant 0 : i32
    %c0_i32_0 = arith.constant 0 : i32
    %c0_i32_1 = arith.constant 0 : i32
    return %c0_i32, %c0_i32_0 : i32, i32
  }
  func.func @transform_2(%arg0: i32, %arg1: i32) -> (i32, i32) {
    %c0_i32 = arith.constant 0 : i32
    %c0_i32_0 = arith.constant 0 : i32
    %c0_i32_1 = arith.constant 0 : i32
    return %c0_i32, %c0_i32_0 : i32, i32
  }
  func.func @transform_3(%arg0: i32, %arg1: i32) -> (i32, i32) {
    %c0_i32 = arith.constant 0 : i32
    %c0_i32_0 = arith.constant 0 : i32
    %c0_i32_1 = arith.constant 0 : i32
    return %c0_i32, %c0_i32_0 : i32, i32
  }
  func.func @transform_4(%arg0: i32, %arg1: i32) -> (i32, i32) {
    %c0_i32 = arith.constant 0 : i32
    %c0_i32_0 = arith.constant 0 : i32
    %c0_i32_1 = arith.constant 0 : i32
    return %c0_i32, %c0_i32_0 : i32, i32
  }
  func.func @transform_5(%arg0: i32, %arg1: i32) -> (i32, i32) {
    %c0_i32 = arith.constant 0 : i32
    %c0_i32_0 = arith.constant 0 : i32
    %c0_i32_1 = arith.constant 0 : i32
    return %c0_i32, %c0_i32_0 : i32, i32
  }
  func.func @transform_6(%arg0: i32, %arg1: i32) -> (i32, i32) {
    %c0_i32 = arith.constant 0 : i32
    %c0_i32_0 = arith.constant 0 : i32
    %c0_i32_1 = arith.constant 0 : i32
    return %c0_i32, %c0_i32_0 : i32, i32
  }
  func.func @transform_7(%arg0: i32, %arg1: i32) -> (i32, i32) {
    %c0_i32 = arith.constant 0 : i32
    %c0_i32_0 = arith.constant 0 : i32
    return %arg1, %c0_i32 : i32, i32
  }
  func.func @transform_8(%arg0: i32, %arg1: i32) -> (i32, i32) {
    %c0_i32 = arith.constant 0 : i32
    %c0_i32_0 = arith.constant 0 : i32
    %c0_i32_1 = arith.constant 0 : i32
    return %c0_i32, %c0_i32_0 : i32, i32
  }
  func.func @transform_9(%arg0: i32, %arg1: i32) -> (i32, i32) {
    %c0_i32 = arith.constant 0 : i32
    return %arg0, %arg1 : i32, i32
  }
}

module attributes {stable_mosaic.version = 11 : i64} {
  func.func @trunk_kernel(%arg0: i32, %arg1: memref<128x2xf32, #tpu.memory_space<vmem>>, %arg2: memref<2x32xf32, #tpu.memory_space<vmem>>, %arg3: memref<1x32xf32, #tpu.memory_space<vmem>>, %arg4: memref<32x32xf32, #tpu.memory_space<vmem>>, %arg5: memref<1x32xf32, #tpu.memory_space<vmem>>, %arg6: memref<32x128xf32, #tpu.memory_space<vmem>>, %arg7: memref<1x128xf32, #tpu.memory_space<vmem>>, %arg8: memref<128x128xf32, #tpu.memory_space<vmem>>) attributes {dimension_semantics = [#tpu.dimension_semantics<parallel>], iteration_bounds = array<i64: 1>, scalar_prefetch = 0 : i64, scratch_operands = 0 : i64, tpu.core_type = #tpu.core_type<tc>, window_params = [{transform_indices = @transform_0, window_bounds = array<i64: 128, 2>}, {pipeline_mode = #tpu.pipeline_mode<synchronous>, transform_indices = @transform_1, window_bounds = array<i64: 2, 32>}, {pipeline_mode = #tpu.pipeline_mode<synchronous>, transform_indices = @transform_2, window_bounds = array<i64: 1, 32>}, {pipeline_mode = #tpu.pipeline_mode<synchronous>, transform_indices = @transform_3, window_bounds = array<i64: 32, 32>}, {pipeline_mode = #tpu.pipeline_mode<synchronous>, transform_indices = @transform_4, window_bounds = array<i64: 1, 32>}, {pipeline_mode = #tpu.pipeline_mode<synchronous>, transform_indices = @transform_5, window_bounds = array<i64: 32, 128>}, {pipeline_mode = #tpu.pipeline_mode<synchronous>, transform_indices = @transform_6, window_bounds = array<i64: 1, 128>}, {transform_indices = @transform_7, window_bounds = array<i64: 128, 128>}]} {
    %c0 = arith.constant 0 : index
    %c0_0 = arith.constant 0 : index
    %0 = vector.load %arg1[%c0, %c0_0] : memref<128x2xf32, #tpu.memory_space<vmem>>, vector<128x2xf32>
    %c0_1 = arith.constant 0 : index
    %c0_2 = arith.constant 0 : index
    %1 = vector.load %arg2[%c0_1, %c0_2] : memref<2x32xf32, #tpu.memory_space<vmem>>, vector<2x32xf32>
    %c0_3 = arith.constant 0 : index
    %c0_4 = arith.constant 0 : index
    %2 = vector.load %arg3[%c0_3, %c0_4] : memref<1x32xf32, #tpu.memory_space<vmem>>, vector<1x32xf32>
    %c0_5 = arith.constant 0 : index
    %c0_6 = arith.constant 0 : index
    %3 = vector.load %arg5[%c0_5, %c0_6] : memref<1x32xf32, #tpu.memory_space<vmem>>, vector<1x32xf32>
    %c0_7 = arith.constant 0 : index
    %c0_8 = arith.constant 0 : index
    %4 = vector.load %arg7[%c0_7, %c0_8] : memref<1x128xf32, #tpu.memory_space<vmem>>, vector<1x128xf32>
    %5 = vector.extract_strided_slice %0 {offsets = [0, 0], sizes = [128, 1], strides = [1, 1]} : vector<128x2xf32> to vector<128x1xf32>
    %6 = vector.extract_strided_slice %1 {offsets = [0, 0], sizes = [1, 32], strides = [1, 1]} : vector<2x32xf32> to vector<1x32xf32>
    %7 = vector.broadcast %5 : vector<128x1xf32> to vector<128x32xf32>
    %8 = vector.broadcast %6 : vector<1x32xf32> to vector<128x32xf32>
    %9 = arith.mulf %7, %8 : vector<128x32xf32>
    %10 = vector.broadcast %2 : vector<1x32xf32> to vector<128x32xf32>
    %11 = arith.addf %10, %9 : vector<128x32xf32>
    %12 = vector.extract_strided_slice %0 {offsets = [0, 1], sizes = [128, 1], strides = [1, 1]} : vector<128x2xf32> to vector<128x1xf32>
    %13 = vector.extract_strided_slice %1 {offsets = [1, 0], sizes = [1, 32], strides = [1, 1]} : vector<2x32xf32> to vector<1x32xf32>
    %14 = vector.broadcast %12 : vector<128x1xf32> to vector<128x32xf32>
    %15 = vector.broadcast %13 : vector<1x32xf32> to vector<128x32xf32>
    %16 = arith.mulf %14, %15 : vector<128x32xf32>
    %17 = arith.addf %11, %16 : vector<128x32xf32>
    %18 = math.tanh %17 : vector<128x32xf32>
    %c0_9 = arith.constant 0 : index
    %c0_10 = arith.constant 0 : index
    %19 = vector.load %arg4[%c0_9, %c0_10] : memref<32x32xf32, #tpu.memory_space<vmem>>, vector<32x32xf32>
    %cst = arith.constant dense<0.000000e+00> : vector<128x32xf32>
    %20 = tpu.matmul %18, %19, %cst {dimension_numbers = #tpu.dot_dimension_numbers<[1], [0], [0], [1], [0, 0, 1, 1], [], []>} : vector<128x32xf32>, vector<32x32xf32>, vector<128x32xf32> -> vector<128x32xf32>
    %21 = vector.broadcast %3 : vector<1x32xf32> to vector<128x32xf32>
    %22 = arith.addf %20, %21 : vector<128x32xf32>
    %23 = math.tanh %22 : vector<128x32xf32>
    %c0_11 = arith.constant 0 : index
    %c0_12 = arith.constant 0 : index
    %24 = vector.load %arg6[%c0_11, %c0_12] : memref<32x128xf32, #tpu.memory_space<vmem>>, vector<32x128xf32>
    %cst_13 = arith.constant dense<0.000000e+00> : vector<128x128xf32>
    %25 = tpu.matmul %23, %24, %cst_13 {dimension_numbers = #tpu.dot_dimension_numbers<[1], [0], [0], [1], [0, 0, 1, 1], [], []>} : vector<128x32xf32>, vector<32x128xf32>, vector<128x128xf32> -> vector<128x128xf32>
    %26 = vector.broadcast %4 : vector<1x128xf32> to vector<128x128xf32>
    %27 = arith.addf %25, %26 : vector<128x128xf32>
    %28 = math.tanh %27 : vector<128x128xf32>
    %c0_14 = arith.constant 0 : index
    %c0_15 = arith.constant 0 : index
    %29 = vector.load %arg8[%c0_14, %c0_15] : memref<128x128xf32, #tpu.memory_space<vmem>>, vector<128x128xf32>
    tpu.vector_store %arg8[%c0_14, %c0_15], %28 {strides = array<i32>} : memref<128x128xf32, #tpu.memory_space<vmem>>, vector<128x128xf32>,
    return
  }
  func.func @transform_0(%arg0: i32) -> (i32, i32) {
    %c0_i32 = arith.constant 0 : i32
    %c0_i32_0 = arith.constant 0 : i32
    return %arg0, %c0_i32 : i32, i32
  }
  func.func @transform_1(%arg0: i32) -> (i32, i32) {
    %c0_i32 = arith.constant 0 : i32
    %c0_i32_0 = arith.constant 0 : i32
    %c0_i32_1 = arith.constant 0 : i32
    return %c0_i32, %c0_i32_0 : i32, i32
  }
  func.func @transform_2(%arg0: i32) -> (i32, i32) {
    %c0_i32 = arith.constant 0 : i32
    %c0_i32_0 = arith.constant 0 : i32
    %c0_i32_1 = arith.constant 0 : i32
    return %c0_i32, %c0_i32_0 : i32, i32
  }
  func.func @transform_3(%arg0: i32) -> (i32, i32) {
    %c0_i32 = arith.constant 0 : i32
    %c0_i32_0 = arith.constant 0 : i32
    %c0_i32_1 = arith.constant 0 : i32
    return %c0_i32, %c0_i32_0 : i32, i32
  }
  func.func @transform_4(%arg0: i32) -> (i32, i32) {
    %c0_i32 = arith.constant 0 : i32
    %c0_i32_0 = arith.constant 0 : i32
    %c0_i32_1 = arith.constant 0 : i32
    return %c0_i32, %c0_i32_0 : i32, i32
  }
  func.func @transform_5(%arg0: i32) -> (i32, i32) {
    %c0_i32 = arith.constant 0 : i32
    %c0_i32_0 = arith.constant 0 : i32
    %c0_i32_1 = arith.constant 0 : i32
    return %c0_i32, %c0_i32_0 : i32, i32
  }
  func.func @transform_6(%arg0: i32) -> (i32, i32) {
    %c0_i32 = arith.constant 0 : i32
    %c0_i32_0 = arith.constant 0 : i32
    %c0_i32_1 = arith.constant 0 : i32
    return %c0_i32, %c0_i32_0 : i32, i32
  }
  func.func @transform_7(%arg0: i32) -> (i32, i32) {
    %c0_i32 = arith.constant 0 : i32
    %c0_i32_0 = arith.constant 0 : i32
    return %arg0, %c0_i32 : i32, i32
  }
}

</mosaic_0001>

<llo_original>
// kernel: deeponet_forward.3
$region0: #{deeponet_forward.3}
  #allocation0 [shape = 'u32[]', space=smem, size = 0x4, offset = 0x4, fixed_abs, tag = 'smem constant byte address 0x4 - core index']
  #allocation1 [shape = 'u32[144,128]{1,0:T(1,128)}', space=vmem, size = 0x12000, scoped, tag = 'internal scratch']
  #allocation2 [shape = 'f32[8,128]{1,0:T(8,128)}', space=vmem, size = 0x1000, scoped, tag = 'scratch operand']
  #allocation3 [shape = 'f32[1,1]{1,0:T(1,128)S(6)}', space=smem, size = 0x200, scoped, tag = 'scoped memory for deeponet_forward.3']
  %s0 = inlined_call_operand.vmem [shape: f32[8,128], index: 0, kind: input, shape index: {}]
  %s1 = inlined_call_operand.vmem [shape: f32[128,32], index: 1, kind: input, shape index: {}]
  %s2 = inlined_call_operand.vmem [shape: f32[1,32], index: 2, kind: input, shape index: {}]
  %s3 = inlined_call_operand.vmem [shape: f32[32,32], index: 3, kind: input, shape index: {}]
  %s4 = inlined_call_operand.vmem [shape: f32[1,32], index: 4, kind: input, shape index: {}]
  %s5 = inlined_call_operand.vmem [shape: f32[32,128], index: 5, kind: input, shape index: {}]
  %s6 = inlined_call_operand.vmem [shape: f32[1,128], index: 6, kind: input, shape index: {}]
  %s7 = inlined_call_operand.vmem [shape: f32[128,128], index: 7, kind: input, shape index: {}]
  %s8 = inlined_call_operand.<no memory space> [shape: f32[1,1], index: 8, kind: input, shape index: {}]
  %s9 = inlined_call_operand.vmem [shape: f32[8,128], index: 9, kind: output, shape index: {}]
  %s10 = sld [smem:[#allocation0]]
  $region50: #{deeponet_forward.3} parent=0
    _
  %s12 = ssub.s32 1, %s10
  %s13 = scalar_select 0, %s12, %s10
  %14 = sst [smem:[#allocation3]] %s8
  // Predicated region
  $region2: #{deeponet_forward.3} parent=0 // pred_check
    _
  $region3: #{deeponet_forward.3} parent=0 // pred_check_branch
    %16 = sbr.rel (0) target = $region5
  $region4: #{deeponet_forward.3} parent=0 // pred_region
    _
  $region5: #{deeponet_forward.3} parent=0 // pred_fallthru
    _
  // Predicated region
  $region6: #{deeponet_forward.3} parent=0 // pred_check
    _
  $region7: #{deeponet_forward.3} parent=0 // pred_check_branch
    %18 = sbr.rel (0) target = $region9
  $region8: #{deeponet_forward.3} parent=0 // pred_region
    _
  $region9: #{deeponet_forward.3} parent=0 // pred_fallthru
    _
  // Predicated region
  $region10: #{deeponet_forward.3} parent=0 // pred_check
    _
  $region11: #{deeponet_forward.3} parent=0 // pred_check_branch
    %20 = sbr.rel (0) target = $region13
  $region12: #{deeponet_forward.3} parent=0 // pred_region
    _
  $region13: #{deeponet_forward.3} parent=0 // pred_fallthru
    _
  // Predicated region
  $region14: #{deeponet_forward.3} parent=0 // pred_check
    _
  $region15: #{deeponet_forward.3} parent=0 // pred_check_branch
    %22 = sbr.rel (0) target = $region17
  $region16: #{deeponet_forward.3} parent=0 // pred_region
    _
  $region17: #{deeponet_forward.3} parent=0 // pred_fallthru
    _
  // Predicated region
  $region18: #{deeponet_forward.3} parent=0 // pred_check
    _
  $region19: #{deeponet_forward.3} parent=0 // pred_check_branch
    %24 = sbr.rel (0) target = $region21
  $region20: #{deeponet_forward.3} parent=0 // pred_region
    _
  $region21: #{deeponet_forward.3} parent=0 // pred_fallthru
    _
  // Predicated region
  $region22: #{deeponet_forward.3} parent=0 // pred_check
    _
  $region23: #{deeponet_forward.3} parent=0 // pred_check_branch
    %26 = sbr.rel (0) target = $region25
  $region24: #{deeponet_forward.3} parent=0 // pred_region
    _
  $region25: #{deeponet_forward.3} parent=0 // pred_fallthru
    _
  // Predicated region
  $region26: #{deeponet_forward.3} parent=0 // pred_check
    _
  $region27: #{deeponet_forward.3} parent=0 // pred_check_branch
    %28 = sbr.rel (0) target = $region29
  $region28: #{deeponet_forward.3} parent=0 // pred_region
    _
  $region29: #{deeponet_forward.3} parent=0 // pred_fallthru
    _
  // Predicated region
  $region30: #{deeponet_forward.3} parent=0 // pred_check
    _
  $region31: #{deeponet_forward.3} parent=0 // pred_check_branch
    %30 = sbr.rel (0) target = $region33
  $region32: #{deeponet_forward.3} parent=0 // pred_region
    _
  $region33: #{deeponet_forward.3} parent=0 // pred_fallthru
    _
  // Predicated region
  $region34: #{deeponet_forward.3} parent=0 // pred_check
    _
  $region35: #{deeponet_forward.3} parent=0 // pred_check_branch
    %32 = sbr.rel (0) target = $region37
  $region36: #{deeponet_forward.3} parent=0 // pred_region
    _
  $region37: #{deeponet_forward.3} parent=0 // pred_fallthru
    _
  %p33 = scmp.eq.s32.totalorder 0, 0
  // Predicated region
  $region38: #{deeponet_forward.3} parent=0 // pred_check
    %p34 = pneg %p33
  $region39: #{deeponet_forward.3} parent=0 // pred_check_branch
    %36 = sbr.rel (%p34) target = $region41
  $region40: #{deeponet_forward.3} parent=0 // pred_region
    %v37 = vld [vmem:[%s2] sm:$0x1]
    %v38 = vld [vmem:[%s4] sm:$0x1]
    %v39 = vld [vmem:[%s6] sm:$0x1]
    %v40 = vld [vmem:[%s0] sm:$0xff]
    %v41 = vld [vmem:[%s1] sm:$0xff]
    %v42 = vld [vmem:[%s1 + $0x8] sm:$0xff]
    %v43 = vld [vmem:[%s1 + $0x10] sm:$0xff]
    %v44 = vld [vmem:[%s1 + $0x18] sm:$0xff]
    %v45 = vld [vmem:[%s1 + $0x20] sm:$0xff]
    %v46 = vld [vmem:[%s1 + $0x28] sm:$0xff]
    %v47 = vld [vmem:[%s1 + $0x30] sm:$0xff]
    %v48 = vld [vmem:[%s1 + $0x38] sm:$0xff]
    %v49 = vld [vmem:[%s1 + $0x40] sm:$0xff]
    %v50 = vld [vmem:[%s1 + $0x48] sm:$0xff]
    %v51 = vld [vmem:[%s1 + $0x50] sm:$0xff]
    %v52 = vld [vmem:[%s1 + $0x58] sm:$0xff]
    %v53 = vld [vmem:[%s1 + $0x60] sm:$0xff]
    %v54 = vld [vmem:[%s1 + $0x68] sm:$0xff]
    %v55 = vld [vmem:[%s1 + $0x70] sm:$0xff]
    %v56 = vld [vmem:[%s1 + $0x78] sm:$0xff]
    %v58 = vlaneseq
    %v59 = vshrl.u32 %v58, 7
    %v60 = vsub.s32 0, %v59
    %v61 = vrot.slane %v37, %v60
    %63 = vmatprep.subr.mxu0 0.0
    %64 = vmatpush1.msra.mxu0 %v41
    %65 = vmatprep.subr.mxu0 0.0
    %66 = vmatpush1.msra.mxu0 %v42
    %67 = vmatprep.subr.mxu0 0.0
    %68 = vmatpush1.msra.mxu0 %v43
    %69 = vmatprep.subr.mxu0 0.0
    %70 = vmatpush1.msra.mxu0 %v44
    %71 = vmatprep.subr.mxu0 0.0
    %72 = vmatpush1.msra.mxu0 %v45
    %73 = vmatprep.subr.mxu0 0.0
    %74 = vmatpush1.msra.mxu0 %v46
    %75 = vmatprep.subr.mxu0 0.0
    %76 = vmatpush1.msra.mxu0 %v47
    %77 = vmatprep.subr.mxu0 0.0
    %78 = vmatpush1.msra.mxu0 %v48
    %79 = vmatprep.subr.mxu0 0.0
    %80 = vmatpush1.msra.mxu0 %v49
    %81 = vmatprep.subr.mxu0 0.0
    %82 = vmatpush1.msra.mxu0 %v50
    %83 = vmatprep.subr.mxu0 0.0
    %84 = vmatpush1.msra.mxu0 %v51
    %85 = vmatprep.subr.mxu0 0.0
    %86 = vmatpush1.msra.mxu0 %v52
    %87 = vmatprep.subr.mxu0 0.0
    %88 = vmatpush1.msra.mxu0 %v53
    %89 = vmatprep.subr.mxu0 0.0
    %90 = vmatpush1.msra.mxu0 %v54
    %91 = vmatprep.subr.mxu0 0.0
    %92 = vmatpush1.msra.mxu0 %v55
    %93 = vmatprep.subr.mxu0 0.0
    %94 = vmatpush1.msra.mxu0 %v56
    %95 = vmatprep.subr.mxu0 0.0
    %96 = vmatpush1.msra.mxu0 0.0
    %97 = vmatprep.subr.mxu0 0.0
    %98 = vmatpush1.msra.mxu0 0.0
    %99 = vmatprep.subr.mxu0 0.0
    %100 = vmatpush1.msra.mxu0 0.0
    %101 = vmatprep.subr.mxu0 0.0
    %102 = vmatpush1.msra.mxu0 0.0
    %103 = vmatprep.subr.mxu0 0.0
    %104 = vmatpush1.msra.mxu0 0.0
    %105 = vmatprep.subr.mxu0 0.0
    %106 = vmatpush1.msra.mxu0 0.0
    %107 = vmatprep.subr.mxu0 0.0
    %108 = vmatpush1.msra.mxu0 0.0
    %109 = vmatprep.subr.mxu0 0.0
    %110 = vmatpush1.msra.mxu0 0.0
    %111 = vmatprep.subr.mxu0 0.0
    %112 = vmatpush1.msra.mxu0 0.0
    %113 = vmatprep.subr.mxu0 0.0
    %114 = vmatpush1.msra.mxu0 0.0
    %115 = vmatprep.subr.mxu0 0.0
    %116 = vmatpush1.msra.mxu0 0.0
    %117 = vmatprep.subr.mxu0 0.0
    %118 = vmatpush1.msra.mxu0 0.0
    %119 = vmatprep.subr.mxu0 0.0
    %120 = vmatpush1.msra.mxu0 0.0
    %121 = vmatprep.subr.mxu0 0.0
    %122 = vmatpush1.msra.mxu0 0.0
    %123 = vmatprep.subr.mxu0 0.0
    %124 = vmatpush1.msra.mxu0 0.0
    %125 = vmatprep.subr.mxu0 0.0
    %126 = vmatpush1.msra.mxu0 0.0
    %127 = vmatprep.mubr.f32.mxu0 0.0
    %128 = vmatmul.mubr.f32.gmra.mrb[0].mxu0 %v40
    %v129 = vpop.f32.mrb[0].mxu0
    %v130 = vadd.f32 %v61, %v129
    %v131 = vpop.f32.mrb[0].mxu0
    %132 = vdwg.mxu0
    %v133 = vmax.f32 %v130, 0.0
    %v134 = vld [vmem:[%s3] sm:$0xff]
    %v135 = vld [vmem:[%s3 + $0x8] sm:$0xff]
    %v136 = vld [vmem:[%s3 + $0x10] sm:$0xff]
    %v137 = vld [vmem:[%s3 + $0x18] sm:$0xff]
    %v139 = vlaneseq
    %v140 = vshrl.u32 %v139, 7
    %v141 = vsub.s32 0, %v140
    %v142 = vrot.slane %v38, %v141
    %vm144 = vcmask 261120
    %v146 = vsel %vm144, %v133, 0
    %148 = vmatprep.subr.mxu0 0.0
    %149 = vmatpush1.msra.mxu0 %v134
    %150 = vmatprep.subr.mxu0 0.0
    %151 = vmatpush1.msra.mxu0 %v135
    %152 = vmatprep.subr.mxu0 0.0
    %153 = vmatpush1.msra.mxu0 %v136
    %154 = vmatprep.subr.mxu0 0.0
    %155 = vmatpush1.msra.mxu0 %v137
    %156 = vmatprep.subr.mxu0 0.0
    %157 = vmatpush1.msra.mxu0 0.0
    %158 = vmatprep.subr.mxu0 0.0
    %159 = vmatpush1.msra.mxu0 0.0
    %160 = vmatprep.subr.mxu0 0.0
    %161 = vmatpush1.msra.mxu0 0.0
    %162 = vmatprep.subr.mxu0 0.0
    %163 = vmatpush1.msra.mxu0 0.0
    %164 = vmatprep.subr.mxu0 0.0
    %165 = vmatpush1.msra.mxu0 0.0
    %166 = vmatprep.subr.mxu0 0.0
    %167 = vmatpush1.msra.mxu0 0.0
    %168 = vmatprep.subr.mxu0 0.0
    %169 = vmatpush1.msra.mxu0 0.0
    %170 = vmatprep.subr.mxu0 0.0
    %171 = vmatpush1.msra.mxu0 0.0
    %172 = vmatprep.subr.mxu0 0.0
    %173 = vmatpush1.msra.mxu0 0.0
    %174 = vmatprep.subr.mxu0 0.0
    %175 = vmatpush1.msra.mxu0 0.0
    %176 = vmatprep.subr.mxu0 0.0
    %177 = vmatpush1.msra.mxu0 0.0
    %178 = vmatprep.subr.mxu0 0.0
    %179 = vmatpush1.msra.mxu0 0.0
    %180 = vmatprep.subr.mxu0 0.0
    %181 = vmatpush1.msra.mxu0 0.0
    %182 = vmatprep.subr.mxu0 0.0
    %183 = vmatpush1.msra.mxu0 0.0
    %184 = vmatprep.subr.mxu0 0.0
    %185 = vmatpush1.msra.mxu0 0.0
    %186 = vmatprep.subr.mxu0 0.0
    %187 = vmatpush1.msra.mxu0 0.0
    %188 = vmatprep.subr.mxu0 0.0
    %189 = vmatpush1.msra.mxu0 0.0
    %190 = vmatprep.subr.mxu0 0.0
    %191 = vmatpush1.msra.mxu0 0.0
    %192 = vmatprep.subr.mxu0 0.0
    %193 = vmatpush1.msra.mxu0 0.0
    %194 = vmatprep.subr.mxu0 0.0
    %195 = vmatpush1.msra.mxu0 0.0
    %196 = vmatprep.subr.mxu0 0.0
    %197 = vmatpush1.msra.mxu0 0.0
    %198 = vmatprep.subr.mxu0 0.0
    %199 = vmatpush1.msra.mxu0 0.0
    %200 = vmatprep.subr.mxu0 0.0
    %201 = vmatpush1.msra.mxu0 0.0
    %202 = vmatprep.subr.mxu0 0.0
    %203 = vmatpush1.msra.mxu0 0.0
    %204 = vmatprep.subr.mxu0 0.0
    %205 = vmatpush1.msra.mxu0 0.0
    %206 = vmatprep.subr.mxu0 0.0
    %207 = vmatpush1.msra.mxu0 0.0
    %208 = vmatprep.subr.mxu0 0.0
    %209 = vmatpush1.msra.mxu0 0.0
    %210 = vmatprep.subr.mxu0 0.0
    %211 = vmatpush1.msra.mxu0 0.0
    %212 = vmatprep.mubr.f32.mxu0 0.0
    %213 = vmatmul.mubr.f32.gmra.mrb[0].mxu0 %v146
    %v214 = vpop.f32.mrb[0].mxu0
    %v215 = vadd.f32 %v142, %v214
    %v216 = vpop.f32.mrb[0].mxu0
    %217 = vdwg.mxu0
    %v218 = vmax.f32 %v215, 0.0
    %v219 = vld [vmem:[%s5] sm:$0xff]
    %v220 = vld [vmem:[%s5 + $0x8] sm:$0xff]
    %v221 = vld [vmem:[%s5 + $0x10] sm:$0xff]
    %v222 = vld [vmem:[%s5 + $0x18] sm:$0xff]
    %v224 = vlaneseq
    %v225 = vshrl.u32 %v224, 7
    %v226 = vsub.s32 0, %v225
    %v227 = vrot.slane %v39, %v226
    %v230 = vsel %vm144, %v218, 0
    %232 = vmatprep.subr.mxu0 0.0
    %233 = vmatpush1.msra.mxu0 %v219
    %234 = vmatprep.subr.mxu0 0.0
    %235 = vmatpush1.msra.mxu0 %v220
    %236 = vmatprep.subr.mxu0 0.0
    %237 = vmatpush1.msra.mxu0 %v221
    %238 = vmatprep.subr.mxu0 0.0
    %239 = vmatpush1.msra.mxu0 %v222
    %240 = vmatprep.subr.mxu0 0.0
    %241 = vmatpush1.msra.mxu0 0.0
    %242 = vmatprep.subr.mxu0 0.0
    %243 = vmatpush1.msra.mxu0 0.0
    %244 = vmatprep.subr.mxu0 0.0
    %245 = vmatpush1.msra.mxu0 0.0
    %246 = vmatprep.subr.mxu0 0.0
    %247 = vmatpush1.msra.mxu0 0.0
    %248 = vmatprep.subr.mxu0 0.0
    %249 = vmatpush1.msra.mxu0 0.0
    %250 = vmatprep.subr.mxu0 0.0
    %251 = vmatpush1.msra.mxu0 0.0
    %252 = vmatprep.subr.mxu0 0.0
    %253 = vmatpush1.msra.mxu0 0.0
    %254 = vmatprep.subr.mxu0 0.0
    %255 = vmatpush1.msra.mxu0 0.0
    %256 = vmatprep.subr.mxu0 0.0
    %257 = vmatpush1.msra.mxu0 0.0
    %258 = vmatprep.subr.mxu0 0.0
    %259 = vmatpush1.msra.mxu0 0.0
    %260 = vmatprep.subr.mxu0 0.0
    %261 = vmatpush1.msra.mxu0 0.0
    %262 = vmatprep.subr.mxu0 0.0
    %263 = vmatpush1.msra.mxu0 0.0
    %264 = vmatprep.subr.mxu0 0.0
    %265 = vmatpush1.msra.mxu0 0.0
    %266 = vmatprep.subr.mxu0 0.0
    %267 = vmatpush1.msra.mxu0 0.0
    %268 = vmatprep.subr.mxu0 0.0
    %269 = vmatpush1.msra.mxu0 0.0
    %270 = vmatprep.subr.mxu0 0.0
    %271 = vmatpush1.msra.mxu0 0.0
    %272 = vmatprep.subr.mxu0 0.0
    %273 = vmatpush1.msra.mxu0 0.0
    %274 = vmatprep.subr.mxu0 0.0
    %275 = vmatpush1.msra.mxu0 0.0
    %276 = vmatprep.subr.mxu0 0.0
    %277 = vmatpush1.msra.mxu0 0.0
    %278 = vmatprep.subr.mxu0 0.0
    %279 = vmatpush1.msra.mxu0 0.0
    %280 = vmatprep.subr.mxu0 0.0
    %281 = vmatpush1.msra.mxu0 0.0
    %282 = vmatprep.subr.mxu0 0.0
    %283 = vmatpush1.msra.mxu0 0.0
    %284 = vmatprep.subr.mxu0 0.0
    %285 = vmatpush1.msra.mxu0 0.0
    %286 = vmatprep.subr.mxu0 0.0
    %287 = vmatpush1.msra.mxu0 0.0
    %288 = vmatprep.subr.mxu0 0.0
    %289 = vmatpush1.msra.mxu0 0.0
    %290 = vmatprep.subr.mxu0 0.0
    %291 = vmatpush1.msra.mxu0 0.0
    %292 = vmatprep.subr.mxu0 0.0
    %293 = vmatpush1.msra.mxu0 0.0
    %294 = vmatprep.subr.mxu0 0.0
    %295 = vmatpush1.msra.mxu0 0.0
    %296 = vmatprep.mubr.f32.mxu0 0.0
    %297 = vmatmul.mubr.f32.gmra.mrb[0].mxu0 %v230
    %v298 = vpop.f32.mrb[0].mxu0
    %v299 = vadd.f32 %v227, %v298
    %v300 = vpop.f32.mrb[0].mxu0
    %301 = vdwg.mxu0
    %302 = vst [vmem:[#allocation2] sm:$0xff] %v299
  $region41: #{deeponet_forward.3} parent=0 // pred_fallthru
    _
  %v303 = vld [vmem:[#allocation2] sm:$0xff]
  %v304 = vld [vmem:[%s7] sm:$0xff]
  %v305 = vld [vmem:[%s7 + $0x8] sm:$0xff]
  %v306 = vld [vmem:[%s7 + $0x10] sm:$0xff]
  %v307 = vld [vmem:[%s7 + $0x18] sm:$0xff]
  %v308 = vld [vmem:[%s7 + $0x20] sm:$0xff]
  %v309 = vld [vmem:[%s7 + $0x28] sm:$0xff]
  %v310 = vld [vmem:[%s7 + $0x30] sm:$0xff]
  %v311 = vld [vmem:[%s7 + $0x38] sm:$0xff]
  %v312 = vld [vmem:[%s7 + $0x40] sm:$0xff]
  %v313 = vld [vmem:[%s7 + $0x48] sm:$0xff]
  %v314 = vld [vmem:[%s7 + $0x50] sm:$0xff]
  %v315 = vld [vmem:[%s7 + $0x58] sm:$0xff]
  %v316 = vld [vmem:[%s7 + $0x60] sm:$0xff]
  %v317 = vld [vmem:[%s7 + $0x68] sm:$0xff]
  %v318 = vld [vmem:[%s7 + $0x70] sm:$0xff]
  %v319 = vld [vmem:[%s7 + $0x78] sm:$0xff]
  %s320 = sld [smem:[#allocation3]]
  %v321 = vstv %s320
  %322 = vmatprep.subr.mxu0 0.0
  %323 = vmatpush1.xpose.msra.mxu0 %v304
  %324 = vmatprep.subr.mxu0 0.0
  %325 = vmatpush1.xpose.msra.mxu0 %v305
  %326 = vmatprep.subr.mxu0 0.0
  %327 = vmatpush1.xpose.msra.mxu0 %v306
  %328 = vmatprep.subr.mxu0 0.0
  %329 = vmatpush1.xpose.msra.mxu0 %v307
  %330 = vmatprep.subr.mxu0 0.0
  %331 = vmatpush1.xpose.msra.mxu0 %v308
  %332 = vmatprep.subr.mxu0 0.0
  %333 = vmatpush1.xpose.msra.mxu0 %v309
  %334 = vmatprep.subr.mxu0 0.0
  %335 = vmatpush1.xpose.msra.mxu0 %v310
  %336 = vmatprep.subr.mxu0 0.0
  %337 = vmatpush1.xpose.msra.mxu0 %v311
  %338 = vmatprep.subr.mxu0 0.0
  %339 = vmatpush1.xpose.msra.mxu0 %v312
  %340 = vmatprep.subr.mxu0 0.0
  %341 = vmatpush1.xpose.msra.mxu0 %v313
  %342 = vmatprep.subr.mxu0 0.0
  %343 = vmatpush1.xpose.msra.mxu0 %v314
  %344 = vmatprep.subr.mxu0 0.0
  %345 = vmatpush1.xpose.msra.mxu0 %v315
  %346 = vmatprep.subr.mxu0 0.0
  %347 = vmatpush1.xpose.msra.mxu0 %v316
  %348 = vmatprep.subr.mxu0 0.0
  %349 = vmatpush1.xpose.msra.mxu0 %v317
  %350 = vmatprep.subr.mxu0 0.0
  %351 = vmatpush1.xpose.msra.mxu0 %v318
  %352 = vmatprep.subr.mxu0 0.0
  %353 = vmatpush1.xpose.msra.mxu0 %v319
  %354 = vmatprep.subr.mxu0 0.0
  %355 = vmatpush1.xpose.msra.mxu0 0.0
  %356 = vmatprep.subr.mxu0 0.0
  %357 = vmatpush1.xpose.msra.mxu0 0.0
  %358 = vmatprep.subr.mxu0 0.0
  %359 = vmatpush1.xpose.msra.mxu0 0.0
  %360 = vmatprep.subr.mxu0 0.0
  %361 = vmatpush1.xpose.msra.mxu0 0.0
  %362 = vmatprep.subr.mxu0 0.0
  %363 = vmatpush1.xpose.msra.mxu0 0.0
  %364 = vmatprep.subr.mxu0 0.0
  %365 = vmatpush1.xpose.msra.mxu0 0.0
  %366 = vmatprep.subr.mxu0 0.0
  %367 = vmatpush1.xpose.msra.mxu0 0.0
  %368 = vmatprep.subr.mxu0 0.0
  %369 = vmatpush1.xpose.msra.mxu0 0.0
  %370 = vmatprep.subr.mxu0 0.0
  %371 = vmatpush1.xpose.msra.mxu0 0.0
  %372 = vmatprep.subr.mxu0 0.0
  %373 = vmatpush1.xpose.msra.mxu0 0.0
  %374 = vmatprep.subr.mxu0 0.0
  %375 = vmatpush1.xpose.msra.mxu0 0.0
  %376 = vmatprep.subr.mxu0 0.0
  %377 = vmatpush1.xpose.msra.mxu0 0.0
  %378 = vmatprep.subr.mxu0 0.0
  %379 = vmatpush1.xpose.msra.mxu0 0.0
  %380 = vmatprep.subr.mxu0 0.0
  %381 = vmatpush1.xpose.msra.mxu0 0.0
  %382 = vmatprep.subr.mxu0 0.0
  %383 = vmatpush1.xpose.msra.mxu0 0.0
  %384 = vmatprep.subr.mxu0 0.0
  %385 = vmatpush1.xpose.msra.mxu0 0.0
  %386 = vmatprep.mubr.f32.mxu0 0.0
  %387 = vmatmul.mubr.f32.gmra.mrb[0].mxu0 %v303
  %v388 = vpop.f32.mrb[0].mxu0
  %v389 = vadd.f32 %v321, %v388
  %v390 = vpop.f32.mrb[0].mxu0
  %391 = vdwg.mxu0
  %392 = vst [vmem:[%s9] sm:$0xff] %v389
  // Predicated region
  $region42: #{deeponet_forward.3} parent=0 // pred_check
    _
  $region43: #{deeponet_forward.3} parent=0 // pred_check_branch
    %394 = sbr.rel (0) target = $region45
  $region44: #{deeponet_forward.3} parent=0 // pred_region
    _
  $region45: #{deeponet_forward.3} parent=0 // pred_fallthru
    _
  // Predicated region
  $region46: #{deeponet_forward.3} parent=0 // pred_check
    _
  $region47: #{deeponet_forward.3} parent=0 // pred_check_branch
    %396 = sbr.rel (0) target = $region49
  $region48: #{deeponet_forward.3} parent=0 // pred_region
    _
  $region49: #{deeponet_forward.3} parent=0 // pred_fallthru
    _

// kernel: deeponet_forward.2
$region0: #{deeponet_forward.2}
  #allocation0 [shape = 'u32[]', space=smem, size = 0x4, offset = 0x4, fixed_abs, tag = 'smem constant byte address 0x4 - core index']
  #allocation1 [shape = 'u32[144,128]{1,0:T(1,128)}', space=vmem, size = 0x12000, scoped, tag = 'internal scratch']
  %s0 = inlined_call_operand.vmem [shape: f32[128,2], index: 0, kind: input, shape index: {}]
  %s1 = inlined_call_operand.vmem [shape: f32[2,32], index: 1, kind: input, shape index: {}]
  %s2 = inlined_call_operand.vmem [shape: f32[1,32], index: 2, kind: input, shape index: {}]
  %s3 = inlined_call_operand.vmem [shape: f32[32,32], index: 3, kind: input, shape index: {}]
  %s4 = inlined_call_operand.vmem [shape: f32[1,32], index: 4, kind: input, shape index: {}]
  %s5 = inlined_call_operand.vmem [shape: f32[32,128], index: 5, kind: input, shape index: {}]
  %s6 = inlined_call_operand.vmem [shape: f32[1,128], index: 6, kind: input, shape index: {}]
  %s7 = inlined_call_operand.vmem [shape: f32[128,128], index: 7, kind: output, shape index: {}]
  %s8 = sld [smem:[#allocation0]]
  $region38: #{deeponet_forward.2} parent=0
    _
  %s10 = ssub.s32 1, %s8
  %s11 = scalar_select 0, %s10, %s8
  // Predicated region
  $region2: #{deeponet_forward.2} parent=0 // pred_check
    _
  $region3: #{deeponet_forward.2} parent=0 // pred_check_branch
    %13 = sbr.rel (0) target = $region5
  $region4: #{deeponet_forward.2} parent=0 // pred_region
    _
  $region5: #{deeponet_forward.2} parent=0 // pred_fallthru
    _
  // Predicated region
  $region6: #{deeponet_forward.2} parent=0 // pred_check
    _
  $region7: #{deeponet_forward.2} parent=0 // pred_check_branch
    %15 = sbr.rel (0) target = $region9
  $region8: #{deeponet_forward.2} parent=0 // pred_region
    _
  $region9: #{deeponet_forward.2} parent=0 // pred_fallthru
    _
  // Predicated region
  $region10: #{deeponet_forward.2} parent=0 // pred_check
    _
  $region11: #{deeponet_forward.2} parent=0 // pred_check_branch
    %17 = sbr.rel (0) target = $region13
  $region12: #{deeponet_forward.2} parent=0 // pred_region
    _
  $region13: #{deeponet_forward.2} parent=0 // pred_fallthru
    _
  // Predicated region
  $region14: #{deeponet_forward.2} parent=0 // pred_check
    _
  $region15: #{deeponet_forward.2} parent=0 // pred_check_branch
    %19 = sbr.rel (0) target = $region17
  $region16: #{deeponet_forward.2} parent=0 // pred_region
    _
  $region17: #{deeponet_forward.2} parent=0 // pred_fallthru
    _
  // Predicated region
  $region18: #{deeponet_forward.2} parent=0 // pred_check
    _
  $region19: #{deeponet_forward.2} parent=0 // pred_check_branch
    %21 = sbr.rel (0) target = $region21
  $region20: #{deeponet_forward.2} parent=0 // pred_region
    _
  $region21: #{deeponet_forward.2} parent=0 // pred_fallthru
    _
  // Predicated region
  $region22: #{deeponet_forward.2} parent=0 // pred_check
    _
  $region23: #{deeponet_forward.2} parent=0 // pred_check_branch
    %23 = sbr.rel (0) target = $region25
  $region24: #{deeponet_forward.2} parent=0 // pred_region
    _
  $region25: #{deeponet_forward.2} parent=0 // pred_fallthru
    _
  // Predicated region
  $region26: #{deeponet_forward.2} parent=0 // pred_check
    _
  $region27: #{deeponet_forward.2} parent=0 // pred_check_branch
    %25 = sbr.rel (0) target = $region29
  $region28: #{deeponet_forward.2} parent=0 // pred_region
    _
  $region29: #{deeponet_forward.2} parent=0 // pred_fallthru
    _
  %v26 = vld [vmem:[%s0] sm:$0xff]
  %v27 = vld [vmem:[%s0 + $0x8] sm:$0xff]
  %v28 = vld [vmem:[%s0 + $0x10] sm:$0xff]
  %v29 = vld [vmem:[%s0 + $0x18] sm:$0xff]
  %v30 = vld [vmem:[%s0 + $0x20] sm:$0xff]
  %v31 = vld [vmem:[%s0 + $0x28] sm:$0xff]
  %v32 = vld [vmem:[%s0 + $0x30] sm:$0xff]
  %v33 = vld [vmem:[%s0 + $0x38] sm:$0xff]
  %v34 = vld [vmem:[%s0 + $0x40] sm:$0xff]
  %v35 = vld [vmem:[%s0 + $0x48] sm:$0xff]
  %v36 = vld [vmem:[%s0 + $0x50] sm:$0xff]
  %v37 = vld [vmem:[%s0 + $0x58] sm:$0xff]
  %v38 = vld [vmem:[%s0 + $0x60] sm:$0xff]
  %v39 = vld [vmem:[%s0 + $0x68] sm:$0xff]
  %v40 = vld [vmem:[%s0 + $0x70] sm:$0xff]
  %v41 = vld [vmem:[%s0 + $0x78] sm:$0xff]
  %v42 = vld [vmem:[%s1] sm:$0x3]
  %v43 = vld [vmem:[%s2] sm:$0x1]
  %v44 = vld [vmem:[%s4] sm:$0x1]
  %v45 = vld [vmem:[%s6] sm:$0x1]
  %47 = vset.pattern.permute.xlu0 0
  %48 = vperm.xlu0 %47, %v26
  %v49 = vpop.permute.xlu0 %48
  %52 = vset.pattern.permute.xlu0 0
  %53 = vperm.xlu0 %52, %v27
  %v54 = vpop.permute.xlu0 %53
  %57 = vset.pattern.permute.xlu0 0
  %58 = vperm.xlu0 %57, %v28
  %v59 = vpop.permute.xlu0 %58
  %62 = vset.pattern.permute.xlu0 0
  %63 = vperm.xlu0 %62, %v29
  %v64 = vpop.permute.xlu0 %63
  %67 = vset.pattern.permute.xlu0 0
  %68 = vperm.xlu0 %67, %v30
  %v69 = vpop.permute.xlu0 %68
  %72 = vset.pattern.permute.xlu0 0
  %73 = vperm.xlu0 %72, %v31
  %v74 = vpop.permute.xlu0 %73
  %77 = vset.pattern.permute.xlu0 0
  %78 = vperm.xlu0 %77, %v32
  %v79 = vpop.permute.xlu0 %78
  %82 = vset.pattern.permute.xlu0 0
  %83 = vperm.xlu0 %82, %v33
  %v84 = vpop.permute.xlu0 %83
  %87 = vset.pattern.permute.xlu0 0
  %88 = vperm.xlu0 %87, %v34
  %v89 = vpop.permute.xlu0 %88
  %92 = vset.pattern.permute.xlu0 0
  %93 = vperm.xlu0 %92, %v35
  %v94 = vpop.permute.xlu0 %93
  %97 = vset.pattern.permute.xlu0 0
  %98 = vperm.xlu0 %97, %v36
  %v99 = vpop.permute.xlu0 %98
  %102 = vset.pattern.permute.xlu0 0
  %103 = vperm.xlu0 %102, %v37
  %v104 = vpop.permute.xlu0 %103
  %107 = vset.pattern.permute.xlu0 0
  %108 = vperm.xlu0 %107, %v38
  %v109 = vpop.permute.xlu0 %108
  %112 = vset.pattern.permute.xlu0 0
  %113 = vperm.xlu0 %112, %v39
  %v114 = vpop.permute.xlu0 %113
  %117 = vset.pattern.permute.xlu0 0
  %118 = vperm.xlu0 %117, %v40
  %v119 = vpop.permute.xlu0 %118
  %122 = vset.pattern.permute.xlu0 0
  %123 = vperm.xlu0 %122, %v41
  %v124 = vpop.permute.xlu0 %123
  %v126 = vlaneseq
  %v127 = vshrl.u32 %v126, 7
  %v128 = vsub.s32 0, %v127
  %v129 = vrot.slane %v42, %v128
  %v130 = vmul.f32 %v49, %v129
  %v131 = vmul.f32 %v54, %v129
  %v132 = vmul.f32 %v59, %v129
  %v133 = vmul.f32 %v64, %v129
  %v134 = vmul.f32 %v69, %v129
  %v135 = vmul.f32 %v74, %v129
  %v136 = vmul.f32 %v79, %v129
  %v137 = vmul.f32 %v84, %v129
  %v138 = vmul.f32 %v89, %v129
  %v139 = vmul.f32 %v94, %v129
  %v140 = vmul.f32 %v99, %v129
  %v141 = vmul.f32 %v104, %v129
  %v142 = vmul.f32 %v109, %v129
  %v143 = vmul.f32 %v114, %v129
  %v144 = vmul.f32 %v119, %v129
  %v145 = vmul.f32 %v124, %v129
  %v147 = vlaneseq
  %v148 = vshrl.u32 %v147, 7
  %v149 = vsub.s32 0, %v148
  %v150 = vrot.slane %v43, %v149
  %v152 = vadd.f32 %v150, %v130
  %v153 = vadd.f32 %v150, %v131
  %v154 = vadd.f32 %v150, %v132
  %v155 = vadd.f32 %v150, %v133
  %v156 = vadd.f32 %v150, %v134
  %v157 = vadd.f32 %v150, %v135
  %v158 = vadd.f32 %v150, %v136
  %v159 = vadd.f32 %v150, %v137
  %v160 = vadd.f32 %v150, %v138
  %v161 = vadd.f32 %v150, %v139
  %v162 = vadd.f32 %v150, %v140
  %v163 = vadd.f32 %v150, %v141
  %v164 = vadd.f32 %v150, %v142
  %v165 = vadd.f32 %v150, %v143
  %v166 = vadd.f32 %v150, %v144
  %v167 = vadd.f32 %v150, %v145
  %168 = vset.pattern.permute.xlu0 1
  %169 = vperm.xlu0 %168, %v26
  %v170 = vpop.permute.xlu0 %169
  %172 = vset.pattern.permute.xlu0 1
  %173 = vperm.xlu0 %172, %v27
  %v174 = vpop.permute.xlu0 %173
  %176 = vset.pattern.permute.xlu0 1
  %177 = vperm.xlu0 %176, %v28
  %v178 = vpop.permute.xlu0 %177
  %180 = vset.pattern.permute.xlu0 1
  %181 = vperm.xlu0 %180, %v29
  %v182 = vpop.permute.xlu0 %181
  %184 = vset.pattern.permute.xlu0 1
  %185 = vperm.xlu0 %184, %v30
  %v186 = vpop.permute.xlu0 %185
  %188 = vset.pattern.permute.xlu0 1
  %189 = vperm.xlu0 %188, %v31
  %v190 = vpop.permute.xlu0 %189
  %192 = vset.pattern.permute.xlu0 1
  %193 = vperm.xlu0 %192, %v32
  %v194 = vpop.permute.xlu0 %193
  %196 = vset.pattern.permute.xlu0 1
  %197 = vperm.xlu0 %196, %v33
  %v198 = vpop.permute.xlu0 %197
  %200 = vset.pattern.permute.xlu0 1
  %201 = vperm.xlu0 %200, %v34
  %v202 = vpop.permute.xlu0 %201
  %204 = vset.pattern.permute.xlu0 1
  %205 = vperm.xlu0 %204, %v35
  %v206 = vpop.permute.xlu0 %205
  %208 = vset.pattern.permute.xlu0 1
  %209 = vperm.xlu0 %208, %v36
  %v210 = vpop.permute.xlu0 %209
  %212 = vset.pattern.permute.xlu0 1
  %213 = vperm.xlu0 %212, %v37
  %v214 = vpop.permute.xlu0 %213
  %216 = vset.pattern.permute.xlu0 1
  %217 = vperm.xlu0 %216, %v38
  %v218 = vpop.permute.xlu0 %217
  %220 = vset.pattern.permute.xlu0 1
  %221 = vperm.xlu0 %220, %v39
  %v222 = vpop.permute.xlu0 %221
  %224 = vset.pattern.permute.xlu0 1
  %225 = vperm.xlu0 %224, %v40
  %v226 = vpop.permute.xlu0 %225
  %228 = vset.pattern.permute.xlu0 1
  %229 = vperm.xlu0 %228, %v41
  %v230 = vpop.permute.xlu0 %229
  %v232 = vlaneseq
  %v233 = vshrl.u32 %v232, 7
  %v234 = vsub.s32 1, %v233
  %v235 = vrot.slane %v42, %v234
  %v236 = vmul.f32 %v170, %v235
  %v237 = vmul.f32 %v174, %v235
  %v238 = vmul.f32 %v178, %v235
  %v239 = vmul.f32 %v182, %v235
  %v240 = vmul.f32 %v186, %v235
  %v241 = vmul.f32 %v190, %v235
  %v242 = vmul.f32 %v194, %v235
  %v243 = vmul.f32 %v198, %v235
  %v244 = vmul.f32 %v202, %v235
  %v245 = vmul.f32 %v206, %v235
  %v246 = vmul.f32 %v210, %v235
  %v247 = vmul.f32 %v214, %v235
  %v248 = vmul.f32 %v218, %v235
  %v249 = vmul.f32 %v222, %v235
  %v250 = vmul.f32 %v226, %v235
  %v251 = vmul.f32 %v230, %v235
  %v252 = vadd.f32 %v152, %v236
  %v253 = vadd.f32 %v153, %v237
  %v254 = vadd.f32 %v154, %v238
  %v255 = vadd.f32 %v155, %v239
  %v256 = vadd.f32 %v156, %v240
  %v257 = vadd.f32 %v157, %v241
  %v258 = vadd.f32 %v158, %v242
  %v259 = vadd.f32 %v159, %v243
  %v260 = vadd.f32 %v160, %v244
  %v261 = vadd.f32 %v161, %v245
  %v262 = vadd.f32 %v162, %v246
  %v263 = vadd.f32 %v163, %v247
  %v264 = vadd.f32 %v164, %v248
  %v265 = vadd.f32 %v165, %v249
  %v266 = vadd.f32 %v166, %v250
  %v267 = vadd.f32 %v167, %v251
  %v268 = vtanh.pop %v252
  %v269 = vtanh.pop %v253
  %v270 = vtanh.pop %v254
  %v271 = vtanh.pop %v255
  %v272 = vtanh.pop %v256
  %v273 = vtanh.pop %v257
  %v274 = vtanh.pop %v258
  %v275 = vtanh.pop %v259
  %v276 = vtanh.pop %v260
  %v277 = vtanh.pop %v261
  %v278 = vtanh.pop %v262
  %v279 = vtanh.pop %v263
  %v280 = vtanh.pop %v264
  %v281 = vtanh.pop %v265
  %v282 = vtanh.pop %v266
  %v283 = vtanh.pop %v267
  %v284 = vld [vmem:[%s3] sm:$0xff]
  %v285 = vld [vmem:[%s3 + $0x8] sm:$0xff]
  %v286 = vld [vmem:[%s3 + $0x10] sm:$0xff]
  %v287 = vld [vmem:[%s3 + $0x18] sm:$0xff]
  %v289 = vlaneseq
  %v290 = vshrl.u32 %v289, 7
  %v291 = vsub.s32 0, %v290
  %v292 = vrot.slane %v44, %v291
  %vm294 = vcmask 261120
  %v296 = vsel %vm294, %v268, 0
  %v299 = vsel %vm294, %v269, 0
  %v302 = vsel %vm294, %v270, 0
  %v305 = vsel %vm294, %v271, 0
  %v308 = vsel %vm294, %v272, 0
  %v311 = vsel %vm294, %v273, 0
  %v314 = vsel %vm294, %v274, 0
  %v317 = vsel %vm294, %v275, 0
  %v320 = vsel %vm294, %v276, 0
  %v323 = vsel %vm294, %v277, 0
  %v326 = vsel %vm294, %v278, 0
  %v329 = vsel %vm294, %v279, 0
  %v332 = vsel %vm294, %v280, 0
  %v335 = vsel %vm294, %v281, 0
  %v338 = vsel %vm294, %v282, 0
  %v341 = vsel %vm294, %v283, 0
  %343 = vmatprep.subr.mxu0 0.0
  %344 = vmatpush1.msra.mxu0 %v284
  %345 = vmatprep.subr.mxu0 0.0
  %346 = vmatpush1.msra.mxu0 %v285
  %347 = vmatprep.subr.mxu0 0.0
  %348 = vmatpush1.msra.mxu0 %v286
  %349 = vmatprep.subr.mxu0 0.0
  %350 = vmatpush1.msra.mxu0 %v287
  %351 = vmatprep.subr.mxu0 0.0
  %352 = vmatpush1.msra.mxu0 0.0
  %353 = vmatprep.subr.mxu0 0.0
  %354 = vmatpush1.msra.mxu0 0.0
  %355 = vmatprep.subr.mxu0 0.0
  %356 = vmatpush1.msra.mxu0 0.0
  %357 = vmatprep.subr.mxu0 0.0
  %358 = vmatpush1.msra.mxu0 0.0
  %359 = vmatprep.subr.mxu0 0.0
  %360 = vmatpush1.msra.mxu0 0.0
  %361 = vmatprep.subr.mxu0 0.0
  %362 = vmatpush1.msra.mxu0 0.0
  %363 = vmatprep.subr.mxu0 0.0
  %364 = vmatpush1.msra.mxu0 0.0
  %365 = vmatprep.subr.mxu0 0.0
  %366 = vmatpush1.msra.mxu0 0.0
  %367 = vmatprep.subr.mxu0 0.0
  %368 = vmatpush1.msra.mxu0 0.0
  %369 = vmatprep.subr.mxu0 0.0
  %370 = vmatpush1.msra.mxu0 0.0
  %371 = vmatprep.subr.mxu0 0.0
  %372 = vmatpush1.msra.mxu0 0.0
  %373 = vmatprep.subr.mxu0 0.0
  %374 = vmatpush1.msra.mxu0 0.0
  %375 = vmatprep.subr.mxu0 0.0
  %376 = vmatpush1.msra.mxu0 0.0
  %377 = vmatprep.subr.mxu0 0.0
  %378 = vmatpush1.msra.mxu0 0.0
  %379 = vmatprep.subr.mxu0 0.0
  %380 = vmatpush1.msra.mxu0 0.0
  %381 = vmatprep.subr.mxu0 0.0
  %382 = vmatpush1.msra.mxu0 0.0
  %383 = vmatprep.subr.mxu0 0.0
  %384 = vmatpush1.msra.mxu0 0.0
  %385 = vmatprep.subr.mxu0 0.0
  %386 = vmatpush1.msra.mxu0 0.0
  %387 = vmatprep.subr.mxu0 0.0
  %388 = vmatpush1.msra.mxu0 0.0
  %389 = vmatprep.subr.mxu0 0.0
  %390 = vmatpush1.msra.mxu0 0.0
  %391 = vmatprep.subr.mxu0 0.0
  %392 = vmatpush1.msra.mxu0 0.0
  %393 = vmatprep.subr.mxu0 0.0
  %394 = vmatpush1.msra.mxu0 0.0
  %395 = vmatprep.subr.mxu0 0.0
  %396 = vmatpush1.msra.mxu0 0.0
  %397 = vmatprep.subr.mxu0 0.0
  %398 = vmatpush1.msra.mxu0 0.0
  %399 = vmatprep.subr.mxu0 0.0
  %400 = vmatpush1.msra.mxu0 0.0
  %401 = vmatprep.subr.mxu0 0.0
  %402 = vmatpush1.msra.mxu0 0.0
  %403 = vmatprep.subr.mxu0 0.0
  %404 = vmatpush1.msra.mxu0 0.0
  %405 = vmatprep.subr.mxu0 0.0
  %406 = vmatpush1.msra.mxu0 0.0
  %407 = vmatprep.mubr.f32.mxu0 0.0
  %408 = vmatmul.mubr.f32.gmra.mrb[0].mxu0 %v296
  %v409 = vpop.f32.mrb[0].mxu0
  %v410 = vadd.f32 %v292, %v409
  %v411 = vpop.f32.mrb[0].mxu0
  %412 = vmatprep.mubr.f32.mxu0 0.0
  %413 = vmatmul.mubr.f32.gmra.mrb[0].mxu0 %v299
  %v414 = vpop.f32.mrb[0].mxu0
  %v415 = vadd.f32 %v292, %v414
  %v416 = vpop.f32.mrb[0].mxu0
  %417 = vmatprep.mubr.f32.mxu0 0.0
  %418 = vmatmul.mubr.f32.gmra.mrb[0].mxu0 %v302
  %v419 = vpop.f32.mrb[0].mxu0
  %v420 = vadd.f32 %v292, %v419
  %v421 = vpop.f32.mrb[0].mxu0
  %422 = vmatprep.mubr.f32.mxu0 0.0
  %423 = vmatmul.mubr.f32.gmra.mrb[0].mxu0 %v305
  %v424 = vpop.f32.mrb[0].mxu0
  %v425 = vadd.f32 %v292, %v424
  %v426 = vpop.f32.mrb[0].mxu0
  %427 = vmatprep.mubr.f32.mxu0 0.0
  %428 = vmatmul.mubr.f32.gmra.mrb[0].mxu0 %v308
  %v429 = vpop.f32.mrb[0].mxu0
  %v430 = vadd.f32 %v292, %v429
  %v431 = vpop.f32.mrb[0].mxu0
  %432 = vmatprep.mubr.f32.mxu0 0.0
  %433 = vmatmul.mubr.f32.gmra.mrb[0].mxu0 %v311
  %v434 = vpop.f32.mrb[0].mxu0
  %v435 = vadd.f32 %v292, %v434
  %v436 = vpop.f32.mrb[0].mxu0
  %437 = vmatprep.mubr.f32.mxu0 0.0
  %438 = vmatmul.mubr.f32.gmra.mrb[0].mxu0 %v314
  %v439 = vpop.f32.mrb[0].mxu0
  %v440 = vadd.f32 %v292, %v439
  %v441 = vpop.f32.mrb[0].mxu0
  %442 = vmatprep.mubr.f32.mxu0 0.0
  %443 = vmatmul.mubr.f32.gmra.mrb[0].mxu0 %v317
  %v444 = vpop.f32.mrb[0].mxu0
  %v445 = vadd.f32 %v292, %v444
  %v446 = vpop.f32.mrb[0].mxu0
  %447 = vmatprep.mubr.f32.mxu0 0.0
  %448 = vmatmul.mubr.f32.gmra.mrb[0].mxu0 %v320
  %v449 = vpop.f32.mrb[0].mxu0
  %v450 = vadd.f32 %v292, %v449
  %v451 = vpop.f32.mrb[0].mxu0
  %452 = vmatprep.mubr.f32.mxu0 0.0
  %453 = vmatmul.mubr.f32.gmra.mrb[0].mxu0 %v323
  %v454 = vpop.f32.mrb[0].mxu0
  %v455 = vadd.f32 %v292, %v454
  %v456 = vpop.f32.mrb[0].mxu0
  %457 = vmatprep.mubr.f32.mxu0 0.0
  %458 = vmatmul.mubr.f32.gmra.mrb[0].mxu0 %v326
  %v459 = vpop.f32.mrb[0].mxu0
  %v460 = vadd.f32 %v292, %v459
  %v461 = vpop.f32.mrb[0].mxu0
  %462 = vmatprep.mubr.f32.mxu0 0.0
  %463 = vmatmul.mubr.f32.gmra.mrb[0].mxu0 %v329
  %v464 = vpop.f32.mrb[0].mxu0
  %v465 = vadd.f32 %v292, %v464
  %v466 = vpop.f32.mrb[0].mxu0
  %467 = vmatprep.mubr.f32.mxu0 0.0
  %468 = vmatmul.mubr.f32.gmra.mrb[0].mxu0 %v332
  %v469 = vpop.f32.mrb[0].mxu0
  %v470 = vadd.f32 %v292, %v469
  %v471 = vpop.f32.mrb[0].mxu0
  %472 = vmatprep.mubr.f32.mxu0 0.0
  %473 = vmatmul.mubr.f32.gmra.mrb[0].mxu0 %v335
  %v474 = vpop.f32.mrb[0].mxu0
  %v475 = vadd.f32 %v292, %v474
  %v476 = vpop.f32.mrb[0].mxu0
  %477 = vmatprep.mubr.f32.mxu0 0.0
  %478 = vmatmul.mubr.f32.gmra.mrb[0].mxu0 %v338
  %v479 = vpop.f32.mrb[0].mxu0
  %v480 = vadd.f32 %v292, %v479
  %v481 = vpop.f32.mrb[0].mxu0
  %482 = vmatprep.mubr.f32.mxu0 0.0
  %483 = vmatmul.mubr.f32.gmra.mrb[0].mxu0 %v341
  %v484 = vpop.f32.mrb[0].mxu0
  %v485 = vadd.f32 %v292, %v484
  %v486 = vpop.f32.mrb[0].mxu0
  %487 = vdwg.mxu0
  %v488 = vtanh.pop %v410
  %v489 = vtanh.pop %v415
  %v490 = vtanh.pop %v420
  %v491 = vtanh.pop %v425
  %v492 = vtanh.pop %v430
  %v493 = vtanh.pop %v435
  %v494 = vtanh.pop %v440
  %v495 = vtanh.pop %v445
  %v496 = vtanh.pop %v450
  %v497 = vtanh.pop %v455
  %v498 = vtanh.pop %v460
  %v499 = vtanh.pop %v465
  %v500 = vtanh.pop %v470
  %v501 = vtanh.pop %v475
  %v502 = vtanh.pop %v480
  %v503 = vtanh.pop %v485
  %v504 = vld [vmem:[%s5] sm:$0xff]
  %v505 = vld [vmem:[%s5 + $0x8] sm:$0xff]
  %v506 = vld [vmem:[%s5 + $0x10] sm:$0xff]
  %v507 = vld [vmem:[%s5 + $0x18] sm:$0xff]
  %v509 = vlaneseq
  %v510 = vshrl.u32 %v509, 7
  %v511 = vsub.s32 0, %v510
  %v512 = vrot.slane %v45, %v511
  %v515 = vsel %vm294, %v488, 0
  %v518 = vsel %vm294, %v489, 0
  %v521 = vsel %vm294, %v490, 0
  %v524 = vsel %vm294, %v491, 0
  %v527 = vsel %vm294, %v492, 0
  %v530 = vsel %vm294, %v493, 0
  %v533 = vsel %vm294, %v494, 0
  %v536 = vsel %vm294, %v495, 0
  %v539 = vsel %vm294, %v496, 0
  %v542 = vsel %vm294, %v497, 0
  %v545 = vsel %vm294, %v498, 0
  %v548 = vsel %vm294, %v499, 0
  %v551 = vsel %vm294, %v500, 0
  %v554 = vsel %vm294, %v501, 0
  %v557 = vsel %vm294, %v502, 0
  %v560 = vsel %vm294, %v503, 0
  %562 = vmatprep.subr.mxu0 0.0
  %563 = vmatpush1.msra.mxu0 %v504
  %564 = vmatprep.subr.mxu0 0.0
  %565 = vmatpush1.msra.mxu0 %v505
  %566 = vmatprep.subr.mxu0 0.0
  %567 = vmatpush1.msra.mxu0 %v506
  %568 = vmatprep.subr.mxu0 0.0
  %569 = vmatpush1.msra.mxu0 %v507
  %570 = vmatprep.subr.mxu0 0.0
  %571 = vmatpush1.msra.mxu0 0.0
  %572 = vmatprep.subr.mxu0 0.0
  %573 = vmatpush1.msra.mxu0 0.0
  %574 = vmatprep.subr.mxu0 0.0
  %575 = vmatpush1.msra.mxu0 0.0
  %576 = vmatprep.subr.mxu0 0.0
  %577 = vmatpush1.msra.mxu0 0.0
  %578 = vmatprep.subr.mxu0 0.0
  %579 = vmatpush1.msra.mxu0 0.0
  %580 = vmatprep.subr.mxu0 0.0
  %581 = vmatpush1.msra.mxu0 0.0
  %582 = vmatprep.subr.mxu0 0.0
  %583 = vmatpush1.msra.mxu0 0.0
  %584 = vmatprep.subr.mxu0 0.0
  %585 = vmatpush1.msra.mxu0 0.0
  %586 = vmatprep.subr.mxu0 0.0
  %587 = vmatpush1.msra.mxu0 0.0
  %588 = vmatprep.subr.mxu0 0.0
  %589 = vmatpush1.msra.mxu0 0.0
  %590 = vmatprep.subr.mxu0 0.0
  %591 = vmatpush1.msra.mxu0 0.0
  %592 = vmatprep.subr.mxu0 0.0
  %593 = vmatpush1.msra.mxu0 0.0
  %594 = vmatprep.subr.mxu0 0.0
  %595 = vmatpush1.msra.mxu0 0.0
  %596 = vmatprep.subr.mxu0 0.0
  %597 = vmatpush1.msra.mxu0 0.0
  %598 = vmatprep.subr.mxu0 0.0
  %599 = vmatpush1.msra.mxu0 0.0
  %600 = vmatprep.subr.mxu0 0.0
  %601 = vmatpush1.msra.mxu0 0.0
  %602 = vmatprep.subr.mxu0 0.0
  %603 = vmatpush1.msra.mxu0 0.0
  %604 = vmatprep.subr.mxu0 0.0
  %605 = vmatpush1.msra.mxu0 0.0
  %606 = vmatprep.subr.mxu0 0.0
  %607 = vmatpush1.msra.mxu0 0.0
  %608 = vmatprep.subr.mxu0 0.0
  %609 = vmatpush1.msra.mxu0 0.0
  %610 = vmatprep.subr.mxu0 0.0
  %611 = vmatpush1.msra.mxu0 0.0
  %612 = vmatprep.subr.mxu0 0.0
  %613 = vmatpush1.msra.mxu0 0.0
  %614 = vmatprep.subr.mxu0 0.0
  %615 = vmatpush1.msra.mxu0 0.0
  %616 = vmatprep.subr.mxu0 0.0
  %617 = vmatpush1.msra.mxu0 0.0
  %618 = vmatprep.subr.mxu0 0.0
  %619 = vmatpush1.msra.mxu0 0.0
  %620 = vmatprep.subr.mxu0 0.0
  %621 = vmatpush1.msra.mxu0 0.0
  %622 = vmatprep.subr.mxu0 0.0
  %623 = vmatpush1.msra.mxu0 0.0
  %624 = vmatprep.subr.mxu0 0.0
  %625 = vmatpush1.msra.mxu0 0.0
  %626 = vmatprep.mubr.f32.mxu0 0.0
  %627 = vmatmul.mubr.f32.gmra.mrb[0].mxu0 %v515
  %v628 = vpop.f32.mrb[0].mxu0
  %v629 = vadd.f32 %v512, %v628
  %v630 = vpop.f32.mrb[0].mxu0
  %631 = vmatprep.mubr.f32.mxu0 0.0
  %632 = vmatmul.mubr.f32.gmra.mrb[0].mxu0 %v518
  %v633 = vpop.f32.mrb[0].mxu0
  %v634 = vadd.f32 %v512, %v633
  %v635 = vpop.f32.mrb[0].mxu0
  %636 = vmatprep.mubr.f32.mxu0 0.0
  %637 = vmatmul.mubr.f32.gmra.mrb[0].mxu0 %v521
  %v638 = vpop.f32.mrb[0].mxu0
  %v639 = vadd.f32 %v512, %v638
  %v640 = vpop.f32.mrb[0].mxu0
  %641 = vmatprep.mubr.f32.mxu0 0.0
  %642 = vmatmul.mubr.f32.gmra.mrb[0].mxu0 %v524
  %v643 = vpop.f32.mrb[0].mxu0
  %v644 = vadd.f32 %v512, %v643
  %v645 = vpop.f32.mrb[0].mxu0
  %646 = vmatprep.mubr.f32.mxu0 0.0
  %647 = vmatmul.mubr.f32.gmra.mrb[0].mxu0 %v527
  %v648 = vpop.f32.mrb[0].mxu0
  %v649 = vadd.f32 %v512, %v648
  %v650 = vpop.f32.mrb[0].mxu0
  %651 = vmatprep.mubr.f32.mxu0 0.0
  %652 = vmatmul.mubr.f32.gmra.mrb[0].mxu0 %v530
  %v653 = vpop.f32.mrb[0].mxu0
  %v654 = vadd.f32 %v512, %v653
  %v655 = vpop.f32.mrb[0].mxu0
  %656 = vmatprep.mubr.f32.mxu0 0.0
  %657 = vmatmul.mubr.f32.gmra.mrb[0].mxu0 %v533
  %v658 = vpop.f32.mrb[0].mxu0
  %v659 = vadd.f32 %v512, %v658
  %v660 = vpop.f32.mrb[0].mxu0
  %661 = vmatprep.mubr.f32.mxu0 0.0
  %662 = vmatmul.mubr.f32.gmra.mrb[0].mxu0 %v536
  %v663 = vpop.f32.mrb[0].mxu0
  %v664 = vadd.f32 %v512, %v663
  %v665 = vpop.f32.mrb[0].mxu0
  %666 = vmatprep.mubr.f32.mxu0 0.0
  %667 = vmatmul.mubr.f32.gmra.mrb[0].mxu0 %v539
  %v668 = vpop.f32.mrb[0].mxu0
  %v669 = vadd.f32 %v512, %v668
  %v670 = vpop.f32.mrb[0].mxu0
  %671 = vmatprep.mubr.f32.mxu0 0.0
  %672 = vmatmul.mubr.f32.gmra.mrb[0].mxu0 %v542
  %v673 = vpop.f32.mrb[0].mxu0
  %v674 = vadd.f32 %v512, %v673
  %v675 = vpop.f32.mrb[0].mxu0
  %676 = vmatprep.mubr.f32.mxu0 0.0
  %677 = vmatmul.mubr.f32.gmra.mrb[0].mxu0 %v545
  %v678 = vpop.f32.mrb[0].mxu0
  %v679 = vadd.f32 %v512, %v678
  %v680 = vpop.f32.mrb[0].mxu0
  %681 = vmatprep.mubr.f32.mxu0 0.0
  %682 = vmatmul.mubr.f32.gmra.mrb[0].mxu0 %v548
  %v683 = vpop.f32.mrb[0].mxu0
  %v684 = vadd.f32 %v512, %v683
  %v685 = vpop.f32.mrb[0].mxu0
  %686 = vmatprep.mubr.f32.mxu0 0.0
  %687 = vmatmul.mubr.f32.gmra.mrb[0].mxu0 %v551
  %v688 = vpop.f32.mrb[0].mxu0
  %v689 = vadd.f32 %v512, %v688
  %v690 = vpop.f32.mrb[0].mxu0
  %691 = vmatprep.mubr.f32.mxu0 0.0
  %692 = vmatmul.mubr.f32.gmra.mrb[0].mxu0 %v554
  %v693 = vpop.f32.mrb[0].mxu0
  %v694 = vadd.f32 %v512, %v693
  %v695 = vpop.f32.mrb[0].mxu0
  %696 = vmatprep.mubr.f32.mxu0 0.0
  %697 = vmatmul.mubr.f32.gmra.mrb[0].mxu0 %v557
  %v698 = vpop.f32.mrb[0].mxu0
  %v699 = vadd.f32 %v512, %v698
  %v700 = vpop.f32.mrb[0].mxu0
  %701 = vmatprep.mubr.f32.mxu0 0.0
  %702 = vmatmul.mubr.f32.gmra.mrb[0].mxu0 %v560
  %v703 = vpop.f32.mrb[0].mxu0
  %v704 = vadd.f32 %v512, %v703
  %v705 = vpop.f32.mrb[0].mxu0
  %706 = vdwg.mxu0
  %v707 = vtanh.pop %v629
  %v708 = vtanh.pop %v634
  %v709 = vtanh.pop %v639
  %v710 = vtanh.pop %v644
  %v711 = vtanh.pop %v649
  %v712 = vtanh.pop %v654
  %v713 = vtanh.pop %v659
  %v714 = vtanh.pop %v664
  %v715 = vtanh.pop %v669
  %v716 = vtanh.pop %v674
  %v717 = vtanh.pop %v679
  %v718 = vtanh.pop %v684
  %v719 = vtanh.pop %v689
  %v720 = vtanh.pop %v694
  %v721 = vtanh.pop %v699
  %v722 = vtanh.pop %v704
  %723 = vst [vmem:[%s7] sm:$0xff] %v707
  %724 = vst [vmem:[%s7 + $0x8] sm:$0xff] %v708
  %725 = vst [vmem:[%s7 + $0x10] sm:$0xff] %v709
  %726 = vst [vmem:[%s7 + $0x18] sm:$0xff] %v710
  %727 = vst [vmem:[%s7 + $0x20] sm:$0xff] %v711
  %728 = vst [vmem:[%s7 + $0x28] sm:$0xff] %v712
  %729 = vst [vmem:[%s7 + $0x30] sm:$0xff] %v713
  %730 = vst [vmem:[%s7 + $0x38] sm:$0xff] %v714
  %731 = vst [vmem:[%s7 + $0x40] sm:$0xff] %v715
  %732 = vst [vmem:[%s7 + $0x48] sm:$0xff] %v716
  %733 = vst [vmem:[%s7 + $0x50] sm:$0xff] %v717
  %734 = vst [vmem:[%s7 + $0x58] sm:$0xff] %v718
  %735 = vst [vmem:[%s7 + $0x60] sm:$0xff] %v719
  %736 = vst [vmem:[%s7 + $0x68] sm:$0xff] %v720
  %737 = vst [vmem:[%s7 + $0x70] sm:$0xff] %v721
  %738 = vst [vmem:[%s7 + $0x78] sm:$0xff] %v722
  // Predicated region
  $region30: #{deeponet_forward.2} parent=0 // pred_check
    _
  $region31: #{deeponet_forward.2} parent=0 // pred_check_branch
    %740 = sbr.rel (0) target = $region33
  $region32: #{deeponet_forward.2} parent=0 // pred_region
    _
  $region33: #{deeponet_forward.2} parent=0 // pred_fallthru
    _
  // Predicated region
  $region34: #{deeponet_forward.2} parent=0 // pred_check
    _
  $region35: #{deeponet_forward.2} parent=0 // pred_check_branch
    %742 = sbr.rel (0) target = $region37
  $region36: #{deeponet_forward.2} parent=0 // pred_region
    _
  $region37: #{deeponet_forward.2} parent=0 // pred_fallthru
    _

</llo_original>
